<compile_context>
chip_gen: v7x
topology: tpu7x:2x2x1
jax: 0.10.0
libtpu: 0.0.40
codegen_flags: <defaults>
</compile_context>

<pallas_src>
import functools

import jax
import jax.numpy as jnp
from jax import lax
from jax.experimental import pallas as pl
from jax.experimental.pallas import tpu as pltpu


def _round_up(x, m):
    return ((x + m - 1) // m) * m


def _coors_norm_kernel(scale_ref, x_ref, o_ref, *, eps):
    # x_ref / o_ref: (D, TILE_C) lane-dense blocks in VMEM (points on lanes).
    # scale_ref: (1,) learned scalar in SMEM, shared by all grid steps.
    x = x_ref[...].astype(jnp.float32)

    # L2 reduction over the coordinate axis (sublanes): D=3 -> 3 sublane adds.
    sumsq = jnp.sum(x * x, axis=0, keepdims=True)            # (1, TILE_C)

    # clamp(norm, eps) followed by divide  ==  multiply by rsqrt(max(sumsq, eps^2)).
    # rsqrt runs on the EUP slot (otherwise idle here).
    inv = lax.rsqrt(jnp.maximum(sumsq, eps * eps))           # (1, TILE_C)

    # Fold the learned scale into the per-point inverse once per column.
    inv_scaled = inv * scale_ref[0]                          # (1, TILE_C)

    o_ref[...] = (x * inv_scaled).astype(o_ref.dtype)


def coors_norm(coors, scale, *, eps=1e-8, tile_cols=32768):
    """CoorsNorm forward: coors / norm(coors, dim=-1).clamp(min=eps) * scale.

    coors: (..., D) array.  scale: (1,) learned scalar parameter.
    tile_cols: lane-dim tile width (multiple of 128). Default tuned for
               v5e/v6e; sweep larger on v7x (more HBM BW) while keeping the
               grid >= 2 so both TensorCores are used.
    """
    orig_shape = coors.shape
    d = orig_shape[-1]

    x2d = coors.reshape(-1, d)
    m = x2d.shape[0]

    # Lane-dense layout: (D, M).  Tile the lane (points) axis.
    tile_c = min(tile_cols, _round_up(max(m, 1), 128))
    grid = pl.cdiv(m, tile_c)
    m_pad = grid * tile_c

    xt = x2d.T                                               # (d, m)
    if m_pad != m:
        # Fused by XLA into the transpose copy above; padded columns are
        # zeros -> sumsq = 0 -> clamped to eps^2 -> output 0, then sliced off.
        xt = jnp.pad(xt, ((0, 0), (0, m_pad - m)))

    kernel = functools.partial(_coors_norm_kernel, eps=eps)

    out_t = pl.pallas_call(
        kernel,
        out_shape=jax.ShapeDtypeStruct((d, m_pad), coors.dtype),
        grid=(grid,),
        in_specs=[
            # Learned scalar scale lives in SMEM.
            pl.BlockSpec(memory_space=pltpu.MemorySpace.SMEM),
            # (D, TILE_C): D is the full sublane extent, TILE_C is a
            # multiple of 128 lanes -> unmasked full-width loads/stores.
            pl.BlockSpec((d, tile_c), lambda i: (0, i)),
        ],
        out_specs=pl.BlockSpec((d, tile_c), lambda i: (0, i)),
        compiler_params=pltpu.CompilerParams(
            dimension_semantics=("parallel",)
        ),
    )(scale.astype(jnp.float32), xt)

    out = out_t[:, :m].T.reshape(orig_shape)
    return out


def coors_norm_ref(coors, scale, eps=1e-8):
    norm = jnp.linalg.norm(coors, axis=-1, keepdims=True)
    return coors / jnp.maximum(norm, eps) * scale


if __name__ == "__main__":
    key = jax.random.PRNGKey(0)

    # --- Test 1: small EGNN-style shape, module defaults (scale_init = 1.0).
    B, N, D = 2, 8, 3
    k1, k2 = jax.random.split(key)
    coors = jax.random.normal(k1, (B, N, D), dtype=jnp.float32)
    scale = jnp.full((1,), 1.0, dtype=jnp.float32)

    out = coors_norm(coors, scale, eps=1e-8)
    out = jax.block_until_ready(out)
    ref = coors_norm_ref(coors, scale, eps=1e-8)
    assert out.shape == coors.shape
    assert jnp.allclose(out, ref, atol=1e-5, rtol=1e-5), "mismatch vs reference (test 1)"

    # --- Test 2: non-aligned node count + small tile_cols to exercise the
    #             multi-tile grid and the padded final tile.
    B2, N2 = 3, 173
    coors2 = jax.random.normal(k2, (B2, N2, D), dtype=jnp.float32)
    scale2 = jnp.full((1,), 0.7, dtype=jnp.float32)

    out2 = coors_norm(coors2, scale2, eps=1e-8, tile_cols=128)
    out2 = jax.block_until_ready(out2)
    ref2 = coors_norm_ref(coors2, scale2, eps=1e-8)
    assert out2.shape == coors2.shape
    assert jnp.allclose(out2, ref2, atol=1e-5, rtol=1e-5), "mismatch vs reference (test 2)"

    print("KERNEL_OK")
</pallas_src>

<mosaic_0001>
module attributes {stable_mosaic.version = 11 : i64} {
  func.func @_coors_norm_kernel(%arg0: i32, %arg1: memref<1xf32, #tpu.memory_space<smem>>, %arg2: memref<3x128xf32, #tpu.memory_space<vmem>>, %arg3: memref<3x128xf32, #tpu.memory_space<vmem>>) attributes {dimension_semantics = [#tpu.dimension_semantics<parallel>], iteration_bounds = array<i64: 1>, scalar_prefetch = 0 : i64, scratch_operands = 0 : i64, tpu.core_type = #tpu.core_type<tc>, window_params = [{transform_indices = @transform_0, window_bounds = array<i64: 1>}, {transform_indices = @transform_1, window_bounds = array<i64: 3, 128>}, {transform_indices = @transform_2, window_bounds = array<i64: 3, 128>}]} {
    %c0 = arith.constant 0 : index
    %c0_0 = arith.constant 0 : index
    %0 = vector.load %arg2[%c0, %c0_0] : memref<3x128xf32, #tpu.memory_space<vmem>>, vector<3x128xf32>
    %1 = arith.mulf %0, %0 : vector<3x128xf32>
    %cst = arith.constant dense<0.000000e+00> : vector<128xf32>
    %2 = vector.multi_reduction <add>, %1, %cst [0] : vector<3x128xf32> to vector<128xf32>
    %3 = vector.shape_cast %2 : vector<128xf32> to vector<1x128xf32>
    %cst_1 = arith.constant 1.000000e-16 : f32
    %4 = vector.broadcast %cst_1 : f32 to vector<1x128xf32>
    %5 = arith.maximumf %3, %4 : vector<1x128xf32>
    %6 = math.rsqrt %5 : vector<1x128xf32>
    %c0_2 = arith.constant 0 : index
    %7 = memref.load %arg1[%c0_2] : memref<1xf32, #tpu.memory_space<smem>>
    %8 = vector.broadcast %7 : f32 to vector<1x128xf32>
    %9 = arith.mulf %6, %8 : vector<1x128xf32>
    %10 = vector.broadcast %9 : vector<1x128xf32> to vector<3x128xf32>
    %11 = arith.mulf %0, %10 : vector<3x128xf32>
    %c0_3 = arith.constant 0 : index
    %c0_4 = arith.constant 0 : index
    %12 = vector.load %arg3[%c0_3, %c0_4] : memref<3x128xf32, #tpu.memory_space<vmem>>, vector<3x128xf32>
    tpu.vector_store %arg3[%c0_3, %c0_4], %11 {strides = array<i32>} : memref<3x128xf32, #tpu.memory_space<vmem>>, vector<3x128xf32>,
    return
  }
  func.func @transform_0(%arg0: i32) -> i32 {
    %c0_i32 = arith.constant 0 : i32
    %c0_i32_0 = arith.constant 0 : i32
    return %c0_i32 : i32
  }
  func.func @transform_1(%arg0: i32) -> (i32, i32) {
    %c0_i32 = arith.constant 0 : i32
    %c0_i32_0 = arith.constant 0 : i32
    return %c0_i32, %arg0 : i32, i32
  }
  func.func @transform_2(%arg0: i32) -> (i32, i32) {
    %c0_i32 = arith.constant 0 : i32
    %c0_i32_0 = arith.constant 0 : i32
    return %c0_i32, %arg0 : i32, i32
  }
}

</mosaic_0001>

<llo_original>
// kernel: tpu_custom_call.1
$region0: #{tpu_custom_call.1}
  #allocation0 [shape = 'u32[]', space=smem, size = 0x4, offset = 0x4, fixed_abs, tag = 'smem constant byte address 0x4 - core index']
  #allocation1 [shape = 'u32[144,128]{1,0:T(1,128)}', space=vmem, size = 0x12000, scoped, tag = 'internal scratch']
  #allocation2 [shape = 'f32[1]{0:T(128)S(6)}', space=smem, size = 0x200, scoped, tag = 'scoped memory for tpu_custom_call.1']
  %s0 = inlined_call_operand.<no memory space> [shape: f32[1], index: 0, kind: input, shape index: {}]
  %s1 = inlined_call_operand.hbm [shape: f32[3,128], index: 1, kind: input, shape index: {}]
  %s2 = inlined_call_operand.hbm [shape: f32[3,128], index: 2, kind: output, shape index: {}]
  %s3 = sld [smem:[#allocation0]]
  $region22: #{tpu_custom_call.1} parent=0
    _
  %s5 = ssub.s32 1, %s3
  %s6 = scalar_select 0, %s5, %s3
  %7 = sst [smem:[#allocation2]] %s0
  $region1: #{tpu_custom_call.1} parent=0
    #allocation3 [shape = 'u8[2048]{0}', space=vmem, size = 0x800, scoped, tag = 'input window, operand 1, single buffered']
    #allocation4 [shape = 's32[1]{0}', space=sflag, size = 0x4, scoped, tag = 'scoped memory for tpu_custom_call.1']
    #allocation5 [shape = 's32[1]{0}', space=sflag, size = 0x4, scoped, tag = 'scoped memory for tpu_custom_call.1']
    #allocation6 [shape = 'u8[2048]{0}', space=vmem, size = 0x800, scoped, tag = 'output window, operand 0, single buffered']
    %8 = vsyncpa [#allocation4], 0
    %9 = vsyncpa [#allocation5], 0
    // Predicated region
    $region2: #{tpu_custom_call.1} parent=1 // pred_check
      _
    $region3: #{tpu_custom_call.1} parent=1 // pred_check_branch
      %11 = sbr.rel (0) target = $region5
    $region4: #{tpu_custom_call.1} parent=1 // pred_region
      _
    $region5: #{tpu_custom_call.1} parent=1 // pred_fallthru
      _
    // Predicated region
    $region6: #{tpu_custom_call.1} parent=1 // pred_check
      _
    $region7: #{tpu_custom_call.1} parent=1 // pred_check_branch
      %13 = sbr.rel (0) target = $region9
    $region8: #{tpu_custom_call.1} parent=1 // pred_region
      %s15 = ssub.s32 64, 64
      %16 = vsyncadd [#allocation4], %s15
      %s18 = sshll.u32 [#allocation3], 4
      %s19 = int_to_ptr.vmem [resolvable:$true] %s18
      %21 = dma.hbm_to_vmem [thread:$0]  %s1, 64, %s19, [#allocation4]
    $region9: #{tpu_custom_call.1} parent=1 // pred_fallthru
      _
    // Predicated region
    $region10: #{tpu_custom_call.1} parent=1 // pred_check
      _
    $region11: #{tpu_custom_call.1} parent=1 // pred_check_branch
      %23 = sbr.rel (0) target = $region13
    $region12: #{tpu_custom_call.1} parent=1 // pred_region
      %24 = dma.done [#allocation4], 64
    $region13: #{tpu_custom_call.1} parent=1 // pred_fallthru
      _
    %v25 = vld [vmem:[#allocation3] sm:$0x7]
    %v26 = vmul.f32 %v25, %v25
    %vm27 = vcmask 1042432
    %v28 = vsel %vm27, %v26, 0.0
    %v29 = vrot.slane %v28, 4
    %v30 = vadd.f32 %v28, %v29
    %v31 = vrot.slane %v30, 2
    %v32 = vadd.f32 %v30, %v31
    %v33 = vrot.slane %v32, 1
    %v34 = vadd.f32 %v32, %v33
    %v35 = vmax.f32 %v34, 1e-16
    %v36 = vrsqrt.pop %v35
    %s37 = sld [smem:[#allocation2]]
    %v38 = vstv %s37
    %v39 = vmul.f32 %v36, %v38
    %v40 = vmul.f32 %v25, %v39
    %41 = vst [vmem:[#allocation6] sm:$0x7] %v40
    // Predicated region
    $region14: #{tpu_custom_call.1} parent=1 // pred_check
      _
    $region15: #{tpu_custom_call.1} parent=1 // pred_check_branch
      %43 = sbr.rel (0) target = $region17
    $region16: #{tpu_custom_call.1} parent=1 // pred_region
      %s45 = ssub.s32 64, 64
      %46 = vsyncadd [#allocation5], %s45
      %s48 = sshll.u32 [#allocation6], 4
      %s49 = int_to_ptr.vmem [resolvable:$true] %s48
      %51 = dma.vmem_to_hbm [thread:$0]  %s49, 64, %s2, [#allocation5]
    $region17: #{tpu_custom_call.1} parent=1 // pred_fallthru
      _
    // Predicated region
    $region18: #{tpu_custom_call.1} parent=1 // pred_check
      _
    $region19: #{tpu_custom_call.1} parent=1 // pred_check_branch
      %53 = sbr.rel (0) target = $region21
    $region20: #{tpu_custom_call.1} parent=1 // pred_region
      %54 = dma.done [#allocation5], 64
    $region21: #{tpu_custom_call.1} parent=1 // pred_fallthru
      _
    %55 = vsyncpa [#allocation4], 1
    %56 = vsyncpa [#allocation5], 1

</llo_original>
